<compile_context>
chip_gen: v5e
topology: v5e:2x2
jax: 0.10.0
libtpu: 0.0.40
codegen_flags: <defaults>
</compile_context>

<pallas_src>
import jax
import jax.numpy as jnp
from jax.experimental import pallas as pl
from jax.experimental.pallas import tpu as pltpu


_MAX_BLOCK_B = 512  # upper bound on batch tile (multiple of 256 / 128)


def _dqn_mlp_kernel(x_ref,
                    w1_ref, b1_ref,
                    w2_ref, b2_ref,
                    w3_ref, b3_ref,
                    w4_ref, b4_ref,
                    o_ref):
    # Hoist bias loads (loop-invariant; avoids re-broadcast per use).
    b1 = b1_ref[...]
    b2 = b2_ref[...]
    b3 = b3_ref[...]
    b4 = b4_ref[...]

    # Layer 1: Linear(num_inputs, 128) + ReLU  (bf16 MXU, f32 accumulate)
    x = x_ref[...].astype(jnp.bfloat16)
    h = jnp.dot(x, w1_ref[...], preferred_element_type=jnp.float32)
    h = jnp.maximum(h + b1, 0.0)
    # Layer 2: Linear(128, 256) + ReLU
    h = jnp.dot(h.astype(jnp.bfloat16), w2_ref[...],
                preferred_element_type=jnp.float32)
    h = jnp.maximum(h + b2, 0.0)
    # Layer 3: Linear(256, 128) + ReLU
    h = jnp.dot(h.astype(jnp.bfloat16), w3_ref[...],
                preferred_element_type=jnp.float32)
    h = jnp.maximum(h + b3, 0.0)
    # Layer 4: Linear(128, num_actions_padded)  (no activation)
    h = jnp.dot(h.astype(jnp.bfloat16), w4_ref[...],
                preferred_element_type=jnp.float32)
    o_ref[...] = (h + b4).astype(o_ref.dtype)


def _round_up(x, m):
    return (x + m - 1) // m * m


def _choose_block_b(B, max_block=_MAX_BLOCK_B):
    """Pick a batch tile: single rounded tile for small B; for large B pick
    the tile count first and derive an (almost) even tile size (mult. of 8)."""
    if B <= max_block:
        return _round_up(B, 8)
    n_tiles = (B + max_block - 1) // max_block
    return _round_up((B + n_tiles - 1) // n_tiles, 8)


def dqn_forward(state, params, *, block_b=None):
    """state: (B, num_inputs) f32; params: dict of transposed weights/biases.

    Weights are (in_features, out_features); biases are (1, out_features).
    """
    B, num_inputs = state.shape
    num_actions = params["w4"].shape[1]
    na_pad = _round_up(num_actions, 128)  # lane-dense output writeback

    if block_b is None:
        block_b = _choose_block_b(B)
    assert block_b % 8 == 0, "block_b must be a multiple of 8 (sublane constraint)"

    grid_b = pl.cdiv(B, block_b)
    B_pad = grid_b * block_b
    x = state if B_pad == B else jnp.pad(state, ((0, B_pad - B), (0, 0)))

    # bf16 weights for the MXU (halves weight DMA bytes too); f32 biases.
    # Last layer padded with zero columns to a 128-lane-multiple output.
    weight_args = []
    w_specs = []
    for idx in (1, 2, 3, 4):
        w = params[f"w{idx}"].astype(jnp.bfloat16)
        b = params[f"b{idx}"].astype(jnp.float32)
        if idx == 4 and na_pad != num_actions:
            w = jnp.pad(w, ((0, 0), (0, na_pad - num_actions)))
            b = jnp.pad(b, ((0, 0), (0, na_pad - num_actions)))
        weight_args += [w, b]
        w_specs.append(pl.BlockSpec(w.shape, lambda i: (0, 0)))
        w_specs.append(pl.BlockSpec(b.shape, lambda i: (0, 0)))

    out = pl.pallas_call(
        _dqn_mlp_kernel,
        out_shape=jax.ShapeDtypeStruct((B_pad, na_pad), state.dtype),
        grid_spec=pltpu.PrefetchScalarGridSpec(
            num_scalar_prefetch=0,
            grid=(grid_b,),
            in_specs=[pl.BlockSpec((block_b, num_inputs), lambda i: (i, 0))]
                     + w_specs,
            out_specs=pl.BlockSpec((block_b, na_pad), lambda i: (i, 0)),
        ),
        compiler_params=pltpu.CompilerParams(
            dimension_semantics=("parallel",)),
    )(x, *weight_args)

    if B_pad != B or na_pad != num_actions:
        out = out[:B, :num_actions]
    return out


def init_params(key, num_inputs, num_actions):
    """Deterministic init mimicking torch.nn.Linear (Kaiming-uniform bounds).

    Weights are stored transposed: (in_features, out_features).
    Biases stored as (1, out_features). Master copies in f32.
    """
    dims = [(num_inputs, 128), (128, 256), (256, 128), (128, num_actions)]
    params = {}
    for idx, (fan_in, fan_out) in enumerate(dims, start=1):
        key, kw, kb = jax.random.split(key, 3)
        bound = 1.0 / jnp.sqrt(jnp.float32(fan_in))
        params[f"w{idx}"] = jax.random.uniform(
            kw, (fan_in, fan_out), jnp.float32, -bound, bound)
        params[f"b{idx}"] = jax.random.uniform(
            kb, (1, fan_out), jnp.float32, -bound, bound)
    return params


def dqn_reference(state, params):
    h = state
    h = jnp.maximum(h @ params["w1"] + params["b1"], 0.0)
    h = jnp.maximum(h @ params["w2"] + params["b2"], 0.0)
    h = jnp.maximum(h @ params["w3"] + params["b3"], 0.0)
    return h @ params["w4"] + params["b4"]


if __name__ == "__main__":
    num_inputs = 16
    num_actions = 8

    key = jax.random.PRNGKey(0)
    key, kx_small, kx_big = jax.random.split(key, 3)
    params = init_params(key, num_inputs, num_actions)

    # Small batch (action-selection style): single tile, rounded to 8 rows.
    B_small = 8
    state_small = jax.random.normal(kx_small, (B_small, num_inputs), jnp.float32)
    out_small = jax.block_until_ready(dqn_forward(state_small, params))
    ref_small = dqn_reference(state_small, params)
    assert out_small.shape == (B_small, num_actions)
    assert jnp.allclose(out_small, ref_small, atol=3e-2, rtol=3e-2)

    # Larger, non-multiple batch: exercises grid tiling + padding + slicing.
    B_big = 600
    state_big = jax.random.normal(kx_big, (B_big, num_inputs), jnp.float32)
    out_big = jax.block_until_ready(dqn_forward(state_big, params))
    ref_big = dqn_reference(state_big, params)
    assert out_big.shape == (B_big, num_actions)
    assert jnp.allclose(out_big, ref_big, atol=3e-2, rtol=3e-2)

    print("KERNEL_OK")
</pallas_src>

<mosaic_0001>
module attributes {stable_mosaic.version = 11 : i64} {
  func.func @_dqn_mlp_kernel(%arg0: i32, %arg1: memref<8x16xf32, #tpu.memory_space<vmem>>, %arg2: memref<16x128xbf16, #tpu.memory_space<vmem>>, %arg3: memref<1x128xf32, #tpu.memory_space<vmem>>, %arg4: memref<128x256xbf16, #tpu.memory_space<vmem>>, %arg5: memref<1x256xf32, #tpu.memory_space<vmem>>, %arg6: memref<256x128xbf16, #tpu.memory_space<vmem>>, %arg7: memref<1x128xf32, #tpu.memory_space<vmem>>, %arg8: memref<128x128xbf16, #tpu.memory_space<vmem>>, %arg9: memref<1x128xf32, #tpu.memory_space<vmem>>, %arg10: memref<8x128xf32, #tpu.memory_space<vmem>>) attributes {dimension_semantics = [#tpu.dimension_semantics<parallel>], iteration_bounds = array<i64: 1>, scalar_prefetch = 0 : i64, scratch_operands = 0 : i64, tpu.core_type = #tpu.core_type<tc>, window_params = [{transform_indices = @transform_0, window_bounds = array<i64: 8, 16>}, {pipeline_mode = #tpu.pipeline_mode<synchronous>, transform_indices = @transform_1, window_bounds = array<i64: 16, 128>}, {pipeline_mode = #tpu.pipeline_mode<synchronous>, transform_indices = @transform_2, window_bounds = array<i64: 1, 128>}, {pipeline_mode = #tpu.pipeline_mode<synchronous>, transform_indices = @transform_3, window_bounds = array<i64: 128, 256>}, {pipeline_mode = #tpu.pipeline_mode<synchronous>, transform_indices = @transform_4, window_bounds = array<i64: 1, 256>}, {pipeline_mode = #tpu.pipeline_mode<synchronous>, transform_indices = @transform_5, window_bounds = array<i64: 256, 128>}, {pipeline_mode = #tpu.pipeline_mode<synchronous>, transform_indices = @transform_6, window_bounds = array<i64: 1, 128>}, {pipeline_mode = #tpu.pipeline_mode<synchronous>, transform_indices = @transform_7, window_bounds = array<i64: 128, 128>}, {pipeline_mode = #tpu.pipeline_mode<synchronous>, transform_indices = @transform_8, window_bounds = array<i64: 1, 128>}, {transform_indices = @transform_9, window_bounds = array<i64: 8, 128>}]} {
    %c0 = arith.constant 0 : index
    %c0_0 = arith.constant 0 : index
    %0 = vector.load %arg3[%c0, %c0_0] : memref<1x128xf32, #tpu.memory_space<vmem>>, vector<1x128xf32>
    %c0_1 = arith.constant 0 : index
    %c0_2 = arith.constant 0 : index
    %1 = vector.load %arg5[%c0_1, %c0_2] : memref<1x256xf32, #tpu.memory_space<vmem>>, vector<1x256xf32>
    %c0_3 = arith.constant 0 : index
    %c0_4 = arith.constant 0 : index
    %2 = vector.load %arg7[%c0_3, %c0_4] : memref<1x128xf32, #tpu.memory_space<vmem>>, vector<1x128xf32>
    %c0_5 = arith.constant 0 : index
    %c0_6 = arith.constant 0 : index
    %3 = vector.load %arg9[%c0_5, %c0_6] : memref<1x128xf32, #tpu.memory_space<vmem>>, vector<1x128xf32>
    %c0_7 = arith.constant 0 : index
    %c0_8 = arith.constant 0 : index
    %4 = vector.load %arg1[%c0_7, %c0_8] : memref<8x16xf32, #tpu.memory_space<vmem>>, vector<8x16xf32>
    %5 = arith.truncf %4 : vector<8x16xf32> to vector<8x16xbf16>
    %c0_9 = arith.constant 0 : index
    %c0_10 = arith.constant 0 : index
    %6 = vector.load %arg2[%c0_9, %c0_10] : memref<16x128xbf16, #tpu.memory_space<vmem>>, vector<16x128xbf16>
    %cst = arith.constant dense<0.000000e+00> : vector<8x128xf32>
    %7 = tpu.matmul %5, %6, %cst {dimension_numbers = #tpu.dot_dimension_numbers<[1], [0], [0], [1], [0, 0, 1, 1], [], []>} : vector<8x16xbf16>, vector<16x128xbf16>, vector<8x128xf32> -> vector<8x128xf32>
    %8 = vector.broadcast %0 : vector<1x128xf32> to vector<8x128xf32>
    %9 = arith.addf %7, %8 : vector<8x128xf32>
    %cst_11 = arith.constant 0.000000e+00 : f32
    %10 = vector.broadcast %cst_11 : f32 to vector<8x128xf32>
    %11 = arith.maximumf %9, %10 : vector<8x128xf32>
    %12 = arith.truncf %11 : vector<8x128xf32> to vector<8x128xbf16>
    %c0_12 = arith.constant 0 : index
    %c0_13 = arith.constant 0 : index
    %13 = vector.load %arg4[%c0_12, %c0_13] : memref<128x256xbf16, #tpu.memory_space<vmem>>, vector<128x256xbf16>
    %cst_14 = arith.constant dense<0.000000e+00> : vector<8x256xf32>
    %14 = tpu.matmul %12, %13, %cst_14 {dimension_numbers = #tpu.dot_dimension_numbers<[1], [0], [0], [1], [0, 0, 1, 1], [], []>} : vector<8x128xbf16>, vector<128x256xbf16>, vector<8x256xf32> -> vector<8x256xf32>
    %15 = vector.broadcast %1 : vector<1x256xf32> to vector<8x256xf32>
    %16 = arith.addf %14, %15 : vector<8x256xf32>
    %cst_15 = arith.constant 0.000000e+00 : f32
    %17 = vector.broadcast %cst_15 : f32 to vector<8x256xf32>
    %18 = arith.maximumf %16, %17 : vector<8x256xf32>
    %19 = arith.truncf %18 : vector<8x256xf32> to vector<8x256xbf16>
    %c0_16 = arith.constant 0 : index
    %c0_17 = arith.constant 0 : index
    %20 = vector.load %arg6[%c0_16, %c0_17] : memref<256x128xbf16, #tpu.memory_space<vmem>>, vector<256x128xbf16>
    %cst_18 = arith.constant dense<0.000000e+00> : vector<8x128xf32>
    %21 = tpu.matmul %19, %20, %cst_18 {dimension_numbers = #tpu.dot_dimension_numbers<[1], [0], [0], [1], [0, 0, 1, 1], [], []>} : vector<8x256xbf16>, vector<256x128xbf16>, vector<8x128xf32> -> vector<8x128xf32>
    %22 = vector.broadcast %2 : vector<1x128xf32> to vector<8x128xf32>
    %23 = arith.addf %21, %22 : vector<8x128xf32>
    %cst_19 = arith.constant 0.000000e+00 : f32
    %24 = vector.broadcast %cst_19 : f32 to vector<8x128xf32>
    %25 = arith.maximumf %23, %24 : vector<8x128xf32>
    %26 = arith.truncf %25 : vector<8x128xf32> to vector<8x128xbf16>
    %c0_20 = arith.constant 0 : index
    %c0_21 = arith.constant 0 : index
    %27 = vector.load %arg8[%c0_20, %c0_21] : memref<128x128xbf16, #tpu.memory_space<vmem>>, vector<128x128xbf16>
    %cst_22 = arith.constant dense<0.000000e+00> : vector<8x128xf32>
    %28 = tpu.matmul %26, %27, %cst_22 {dimension_numbers = #tpu.dot_dimension_numbers<[1], [0], [0], [1], [0, 0, 1, 1], [], []>} : vector<8x128xbf16>, vector<128x128xbf16>, vector<8x128xf32> -> vector<8x128xf32>
    %29 = vector.broadcast %3 : vector<1x128xf32> to vector<8x128xf32>
    %30 = arith.addf %28, %29 : vector<8x128xf32>
    %c0_23 = arith.constant 0 : index
    %c0_24 = arith.constant 0 : index
    %31 = vector.load %arg10[%c0_23, %c0_24] : memref<8x128xf32, #tpu.memory_space<vmem>>, vector<8x128xf32>
    tpu.vector_store %arg10[%c0_23, %c0_24], %30 {strides = array<i32>} : memref<8x128xf32, #tpu.memory_space<vmem>>, vector<8x128xf32>,
    return
  }
  func.func @transform_0(%arg0: i32) -> (i32, i32) {
    %c0_i32 = arith.constant 0 : i32
    %c0_i32_0 = arith.constant 0 : i32
    return %arg0, %c0_i32 : i32, i32
  }
  func.func @transform_1(%arg0: i32) -> (i32, i32) {
    %c0_i32 = arith.constant 0 : i32
    %c0_i32_0 = arith.constant 0 : i32
    %c0_i32_1 = arith.constant 0 : i32
    return %c0_i32, %c0_i32_0 : i32, i32
  }
  func.func @transform_2(%arg0: i32) -> (i32, i32) {
    %c0_i32 = arith.constant 0 : i32
    %c0_i32_0 = arith.constant 0 : i32
    %c0_i32_1 = arith.constant 0 : i32
    return %c0_i32, %c0_i32_0 : i32, i32
  }
  func.func @transform_3(%arg0: i32) -> (i32, i32) {
    %c0_i32 = arith.constant 0 : i32
    %c0_i32_0 = arith.constant 0 : i32
    %c0_i32_1 = arith.constant 0 : i32
    return %c0_i32, %c0_i32_0 : i32, i32
  }
  func.func @transform_4(%arg0: i32) -> (i32, i32) {
    %c0_i32 = arith.constant 0 : i32
    %c0_i32_0 = arith.constant 0 : i32
    %c0_i32_1 = arith.constant 0 : i32
    return %c0_i32, %c0_i32_0 : i32, i32
  }
  func.func @transform_5(%arg0: i32) -> (i32, i32) {
    %c0_i32 = arith.constant 0 : i32
    %c0_i32_0 = arith.constant 0 : i32
    %c0_i32_1 = arith.constant 0 : i32
    return %c0_i32, %c0_i32_0 : i32, i32
  }
  func.func @transform_6(%arg0: i32) -> (i32, i32) {
    %c0_i32 = arith.constant 0 : i32
    %c0_i32_0 = arith.constant 0 : i32
    %c0_i32_1 = arith.constant 0 : i32
    return %c0_i32, %c0_i32_0 : i32, i32
  }
  func.func @transform_7(%arg0: i32) -> (i32, i32) {
    %c0_i32 = arith.constant 0 : i32
    %c0_i32_0 = arith.constant 0 : i32
    %c0_i32_1 = arith.constant 0 : i32
    return %c0_i32, %c0_i32_0 : i32, i32
  }
  func.func @transform_8(%arg0: i32) -> (i32, i32) {
    %c0_i32 = arith.constant 0 : i32
    %c0_i32_0 = arith.constant 0 : i32
    %c0_i32_1 = arith.constant 0 : i32
    return %c0_i32, %c0_i32_0 : i32, i32
  }
  func.func @transform_9(%arg0: i32) -> (i32, i32) {
    %c0_i32 = arith.constant 0 : i32
    %c0_i32_0 = arith.constant 0 : i32
    return %arg0, %c0_i32 : i32, i32
  }
}

</mosaic_0001>

<llo_original>
// kernel: tpu_custom_call.1
$region0: #{tpu_custom_call.1}
  #allocation0 [shape = 'u32[]', space=smem, size = 0x4, offset = 0x4, fixed_abs, tag = 'smem constant byte address 0x4 - core index']
  #allocation1 [shape = 'u32[72,128]{1,0:T(1,128)}', space=vmem, size = 0x9000, scoped, tag = 'internal scratch']
  %s0 = inlined_call_operand.hbm [shape: f32[8,16], index: 0, kind: input, shape index: {}]
  %s1 = inlined_call_operand.hbm [shape: bf16[16,128], index: 1, kind: input, shape index: {}]
  %s2 = inlined_call_operand.vmem [shape: f32[1,128], index: 2, kind: input, shape index: {}]
  %s3 = inlined_call_operand.hbm [shape: bf16[128,256], index: 3, kind: input, shape index: {}]
  %s4 = inlined_call_operand.vmem [shape: f32[1,256], index: 4, kind: input, shape index: {}]
  %s5 = inlined_call_operand.hbm [shape: bf16[256,128], index: 5, kind: input, shape index: {}]
  %s6 = inlined_call_operand.vmem [shape: f32[1,128], index: 6, kind: input, shape index: {}]
  %s7 = inlined_call_operand.hbm [shape: bf16[128,128], index: 7, kind: input, shape index: {}]
  %s8 = inlined_call_operand.vmem [shape: f32[1,128], index: 8, kind: input, shape index: {}]
  %s9 = inlined_call_operand.hbm [shape: f32[8,128], index: 9, kind: output, shape index: {}]
  %s10 = sld [smem:[#allocation0]]
  $region66: #{tpu_custom_call.1} parent=0
    _
  %s12 = ssub.s32 1, %s10
  %s13 = scalar_select 0, %s12, %s10
  $region1: #{tpu_custom_call.1} parent=0
    #allocation2 [shape = 'u8[4096]{0}', space=vmem, size = 0x1000, scoped, tag = 'input window, operand 0, single buffered']
    #allocation3 [shape = 's32[1]{0}', space=sflag, size = 0x4, scoped, tag = 'scoped memory for tpu_custom_call.1']
    #allocation4 [shape = 's32[1]{0}', space=sflag, size = 0x4, scoped, tag = 'scoped memory for tpu_custom_call.1']
    #allocation5 [shape = 'u8[4096]{0}', space=vmem, size = 0x1000, scoped, tag = 'input window, operand 1, single buffered']
    #allocation6 [shape = 's32[1]{0}', space=sflag, size = 0x4, scoped, tag = 'scoped memory for tpu_custom_call.1']
    #allocation7 [shape = 'u8[65536]{0}', space=vmem, size = 0x10000, scoped, tag = 'input window, operand 3, single buffered']
    #allocation8 [shape = 'u8[65536]{0}', space=vmem, size = 0x10000, scoped, tag = 'input window, operand 5, single buffered']
    #allocation9 [shape = 's32[1]{0}', space=sflag, size = 0x4, scoped, tag = 'scoped memory for tpu_custom_call.1']
    #allocation10 [shape = 'u8[32768]{0}', space=vmem, size = 0x8000, scoped, tag = 'input window, operand 7, single buffered']
    #allocation11 [shape = 'u8[4096]{0}', space=vmem, size = 0x1000, scoped, tag = 'output window, operand 0, single buffered']
    %14 = vsyncpa [#allocation3], 0
    %15 = vsyncpa [#allocation6], 0
    %16 = vsyncpa [#allocation9], 0
    %17 = vsyncpa [#allocation4], 0
    // Predicated region
    $region2: #{tpu_custom_call.1} parent=1 // pred_check
      _
    $region3: #{tpu_custom_call.1} parent=1 // pred_check_branch
      %19 = sbr.rel (0) target = $region5
    $region4: #{tpu_custom_call.1} parent=1 // pred_region
      %21 = vsyncadd [#allocation3], 0
      %s23 = sshll.u32 %s0, 4
      %s24 = int_to_ptr.hbm [resolvable:$true] %s23
      %s25 = sshll.u32 [#allocation2], 4
      %s26 = int_to_ptr.vmem [resolvable:$true] %s25
      %28 = dma.hbm_to_vmem [thread:$0]  %s24, 128, %s26, [#allocation3]
    $region5: #{tpu_custom_call.1} parent=1 // pred_fallthru
      _
    // Predicated region
    $region6: #{tpu_custom_call.1} parent=1 // pred_check
      _
    $region7: #{tpu_custom_call.1} parent=1 // pred_check_branch
      %30 = sbr.rel (0) target = $region9
    $region8: #{tpu_custom_call.1} parent=1 // pred_region
      %32 = vsyncadd [#allocation6], 0
      %s33 = sshll.u32 %s1, 4
      %s34 = int_to_ptr.hbm [resolvable:$true] %s33
      %s35 = sshll.u32 [#allocation5], 4
      %s36 = int_to_ptr.vmem [resolvable:$true] %s35
      %41 = dma.hbm_to_vmem [thread:$0]  %s34, 128, %s36, [#allocation6], 64, 64, 4
    $region9: #{tpu_custom_call.1} parent=1 // pred_fallthru
      _
    // Predicated region
    $region10: #{tpu_custom_call.1} parent=1 // pred_check
      _
    $region11: #{tpu_custom_call.1} parent=1 // pred_check_branch
      %43 = sbr.rel (0) target = $region13
    $region12: #{tpu_custom_call.1} parent=1 // pred_region
      _
    $region13: #{tpu_custom_call.1} parent=1 // pred_fallthru
      _
    // Predicated region
    $region14: #{tpu_custom_call.1} parent=1 // pred_check
      _
    $region15: #{tpu_custom_call.1} parent=1 // pred_check_branch
      %45 = sbr.rel (0) target = $region17
    $region16: #{tpu_custom_call.1} parent=1 // pred_region
      %47 = vsyncadd [#allocation6], 0
      %s48 = sshll.u32 %s3, 4
      %s49 = int_to_ptr.hbm [resolvable:$true] %s48
      %s50 = sshll.u32 [#allocation7], 4
      %s51 = int_to_ptr.vmem [resolvable:$true] %s50
      %56 = dma.hbm_to_vmem [thread:$0]  %s49, 2048, %s51, [#allocation6], 128, 128, 8
    $region17: #{tpu_custom_call.1} parent=1 // pred_fallthru
      _
    // Predicated region
    $region18: #{tpu_custom_call.1} parent=1 // pred_check
      _
    $region19: #{tpu_custom_call.1} parent=1 // pred_check_branch
      %58 = sbr.rel (0) target = $region21
    $region20: #{tpu_custom_call.1} parent=1 // pred_region
      _
    $region21: #{tpu_custom_call.1} parent=1 // pred_fallthru
      _
    // Predicated region
    $region22: #{tpu_custom_call.1} parent=1 // pred_check
      _
    $region23: #{tpu_custom_call.1} parent=1 // pred_check_branch
      %60 = sbr.rel (0) target = $region25
    $region24: #{tpu_custom_call.1} parent=1 // pred_region
      %62 = vsyncadd [#allocation9], 0
      %s63 = sshll.u32 %s5, 4
      %s64 = int_to_ptr.hbm [resolvable:$true] %s63
      %s65 = sshll.u32 [#allocation8], 4
      %s66 = int_to_ptr.vmem [resolvable:$true] %s65
      %71 = dma.hbm_to_vmem [thread:$0]  %s64, 2048, %s66, [#allocation9], 64, 64, 4
    $region25: #{tpu_custom_call.1} parent=1 // pred_fallthru
      _
    // Predicated region
    $region26: #{tpu_custom_call.1} parent=1 // pred_check
      _
    $region27: #{tpu_custom_call.1} parent=1 // pred_check_branch
      %73 = sbr.rel (0) target = $region29
    $region28: #{tpu_custom_call.1} parent=1 // pred_region
      _
    $region29: #{tpu_custom_call.1} parent=1 // pred_fallthru
      _
    // Predicated region
    $region30: #{tpu_custom_call.1} parent=1 // pred_check
      _
    $region31: #{tpu_custom_call.1} parent=1 // pred_check_branch
      %75 = sbr.rel (0) target = $region33
    $region32: #{tpu_custom_call.1} parent=1 // pred_region
      %77 = vsyncadd [#allocation9], 0
      %s78 = sshll.u32 %s7, 4
      %s79 = int_to_ptr.hbm [resolvable:$true] %s78
      %s80 = sshll.u32 [#allocation10], 4
      %s81 = int_to_ptr.vmem [resolvable:$true] %s80
      %86 = dma.hbm_to_vmem [thread:$0]  %s79, 1024, %s81, [#allocation9], 64, 64, 4
    $region33: #{tpu_custom_call.1} parent=1 // pred_fallthru
      _
    // Predicated region
    $region34: #{tpu_custom_call.1} parent=1 // pred_check
      _
    $region35: #{tpu_custom_call.1} parent=1 // pred_check_branch
      %88 = sbr.rel (0) target = $region37
    $region36: #{tpu_custom_call.1} parent=1 // pred_region
      _
    $region37: #{tpu_custom_call.1} parent=1 // pred_fallthru
      _
    // Predicated region
    $region38: #{tpu_custom_call.1} parent=1 // pred_check
      _
    $region39: #{tpu_custom_call.1} parent=1 // pred_check_branch
      %90 = sbr.rel (0) target = $region41
    $region40: #{tpu_custom_call.1} parent=1 // pred_region
      %92 = dma.done [#allocation3], 128
    $region41: #{tpu_custom_call.1} parent=1 // pred_fallthru
      _
    // Predicated region
    $region42: #{tpu_custom_call.1} parent=1 // pred_check
      _
    $region43: #{tpu_custom_call.1} parent=1 // pred_check_branch
      %94 = sbr.rel (0) target = $region45
    $region44: #{tpu_custom_call.1} parent=1 // pred_region
      %96 = dma.done [#allocation6], 128
    $region45: #{tpu_custom_call.1} parent=1 // pred_fallthru
      _
    // Predicated region
    $region46: #{tpu_custom_call.1} parent=1 // pred_check
      _
    $region47: #{tpu_custom_call.1} parent=1 // pred_check_branch
      %98 = sbr.rel (0) target = $region49
    $region48: #{tpu_custom_call.1} parent=1 // pred_region
      %100 = dma.done [#allocation6], 2048
    $region49: #{tpu_custom_call.1} parent=1 // pred_fallthru
      _
    // Predicated region
    $region50: #{tpu_custom_call.1} parent=1 // pred_check
      _
    $region51: #{tpu_custom_call.1} parent=1 // pred_check_branch
      %102 = sbr.rel (0) target = $region53
    $region52: #{tpu_custom_call.1} parent=1 // pred_region
      %104 = dma.done [#allocation9], 2048
    $region53: #{tpu_custom_call.1} parent=1 // pred_fallthru
      _
    // Predicated region
    $region54: #{tpu_custom_call.1} parent=1 // pred_check
      _
    $region55: #{tpu_custom_call.1} parent=1 // pred_check_branch
      %106 = sbr.rel (0) target = $region57
    $region56: #{tpu_custom_call.1} parent=1 // pred_region
      %108 = dma.done [#allocation9], 1024
    $region57: #{tpu_custom_call.1} parent=1 // pred_fallthru
      _
    %v110 = vld [vmem:[%s2] sm:$0x1]
    %v111 = vld [vmem:[%s4] sm:$0x3]
    %v112 = vld [vmem:[%s6] sm:$0x1]
    %v113 = vld [vmem:[%s8] sm:$0x1]
    %v114 = vld [vmem:[#allocation2] sm:$0xff]
    %v115 = vpack.c.bf16 %v114, %v114
    %v116 = vld [vmem:[#allocation5] sm:$0xf]
    %v117 = vld [vmem:[#allocation5 + $0x4] sm:$0xf]
    %v119 = vperm.slane %v110, 0
    %v123 = vunpack.c.l.b16 %v116
    %v124 = vunpack.c.l.b16 %v117
    %v125 = vpack.c.b16 %v124, %v123
    %vm127 = vcmask 130048
    %v129 = vsel %vm127, %v115, 0
    %131 = vmatpush.bf16.msra.mxu0 0
    %132 = vmatpush.bf16.msra.mxu0 0
    %133 = vmatpush.bf16.msra.mxu0 0
    %134 = vmatpush.bf16.msra.mxu0 0
    %135 = vmatpush.bf16.msra.mxu0 0
    %136 = vmatpush.bf16.msra.mxu0 0
    %137 = vmatpush.bf16.msra.mxu0 0
    %138 = vmatpush.bf16.msra.mxu0 %v125
    %139 = vmatmul.bf16.gmra.mxu0 %v129
    %v140 = vpop.f32.mrf.mxu0
    %v141 = vadd.f32 %v119, %v140
    %v142 = vpop.f32.mrf.mxu0
    %143 = vdwg.mxu0
    %v144 = vmax.f32 %v141, 0.0
    %v145 = vpack.c.bf16 %v144, %v144
    %v146 = vld [vmem:[#allocation7] sm:$0xff]
    %v147 = vld [vmem:[#allocation7 + $0x8] sm:$0xff]
    %v148 = vld [vmem:[#allocation7 + $0x10] sm:$0xff]
    %v149 = vld [vmem:[#allocation7 + $0x18] sm:$0xff]
    %v150 = vld [vmem:[#allocation7 + $0x20] sm:$0xff]
    %v151 = vld [vmem:[#allocation7 + $0x28] sm:$0xff]
    %v152 = vld [vmem:[#allocation7 + $0x30] sm:$0xff]
    %v153 = vld [vmem:[#allocation7 + $0x38] sm:$0xff]
    %v154 = vld [vmem:[#allocation7 + $0x40] sm:$0xff]
    %v155 = vld [vmem:[#allocation7 + $0x48] sm:$0xff]
    %v156 = vld [vmem:[#allocation7 + $0x50] sm:$0xff]
    %v157 = vld [vmem:[#allocation7 + $0x58] sm:$0xff]
    %v158 = vld [vmem:[#allocation7 + $0x60] sm:$0xff]
    %v159 = vld [vmem:[#allocation7 + $0x68] sm:$0xff]
    %v160 = vld [vmem:[#allocation7 + $0x70] sm:$0xff]
    %v161 = vld [vmem:[#allocation7 + $0x78] sm:$0xff]
    %v163 = vperm.slane %v111, 0
    %v164 = vperm.slane %v111, 1
    %v183 = vunpack.c.l.b16 %v146
    %v184 = vunpack.c.h.b16 %v146
    %v185 = vunpack.c.l.b16 %v147
    %v186 = vunpack.c.h.b16 %v147
    %v187 = vunpack.c.l.b16 %v148
    %v188 = vunpack.c.h.b16 %v148
    %v189 = vunpack.c.l.b16 %v149
    %v190 = vunpack.c.h.b16 %v149
    %v191 = vunpack.c.l.b16 %v150
    %v192 = vunpack.c.h.b16 %v150
    %v193 = vunpack.c.l.b16 %v151
    %v194 = vunpack.c.h.b16 %v151
    %v195 = vunpack.c.l.b16 %v152
    %v196 = vunpack.c.h.b16 %v152
    %v197 = vunpack.c.l.b16 %v153
    %v198 = vunpack.c.h.b16 %v153
    %v199 = vunpack.c.l.b16 %v154
    %v200 = vunpack.c.h.b16 %v154
    %v201 = vunpack.c.l.b16 %v155
    %v202 = vunpack.c.h.b16 %v155
    %v203 = vunpack.c.l.b16 %v156
    %v204 = vunpack.c.h.b16 %v156
    %v205 = vunpack.c.l.b16 %v157
    %v206 = vunpack.c.h.b16 %v157
    %v207 = vunpack.c.l.b16 %v158
    %v208 = vunpack.c.h.b16 %v158
    %v209 = vunpack.c.l.b16 %v159
    %v210 = vunpack.c.h.b16 %v159
    %v211 = vunpack.c.l.b16 %v160
    %v212 = vunpack.c.h.b16 %v160
    %v213 = vunpack.c.l.b16 %v161
    %v214 = vunpack.c.h.b16 %v161
    %v215 = vpack.c.b16 %v185, %v183
    %v216 = vpack.c.b16 %v186, %v184
    %v217 = vpack.c.b16 %v189, %v187
    %v218 = vpack.c.b16 %v190, %v188
    %v219 = vpack.c.b16 %v193, %v191
    %v220 = vpack.c.b16 %v194, %v192
    %v221 = vpack.c.b16 %v197, %v195
    %v222 = vpack.c.b16 %v198, %v196
    %v223 = vpack.c.b16 %v201, %v199
    %v224 = vpack.c.b16 %v202, %v200
    %v225 = vpack.c.b16 %v205, %v203
    %v226 = vpack.c.b16 %v206, %v204
    %v227 = vpack.c.b16 %v209, %v207
    %v228 = vpack.c.b16 %v210, %v208
    %v229 = vpack.c.b16 %v213, %v211
    %v230 = vpack.c.b16 %v214, %v212
    %247 = vmatpush.bf16.msra.mxu0 %v229
    %248 = vmatpush.bf16.msra.mxu0 %v227
    %249 = vmatpush.bf16.msra.mxu0 %v225
    %250 = vmatpush.bf16.msra.mxu0 %v223
    %251 = vmatpush.bf16.msra.mxu0 %v221
    %252 = vmatpush.bf16.msra.mxu0 %v219
    %253 = vmatpush.bf16.msra.mxu0 %v217
    %254 = vmatpush.bf16.msra.mxu0 %v215
    %255 = vmatmul.bf16.gmra.mxu0 %v145
    %v256 = vpop.f32.mrf.mxu0
    %v257 = vadd.f32 %v163, %v256
    %v258 = vpop.f32.mrf.mxu0
    %259 = vdwg.mxu0
    %260 = vmatpush.bf16.msra.mxu0 %v230
    %261 = vmatpush.bf16.msra.mxu0 %v228
    %262 = vmatpush.bf16.msra.mxu0 %v226
    %263 = vmatpush.bf16.msra.mxu0 %v224
    %264 = vmatpush.bf16.msra.mxu0 %v222
    %265 = vmatpush.bf16.msra.mxu0 %v220
    %266 = vmatpush.bf16.msra.mxu0 %v218
    %267 = vmatpush.bf16.msra.mxu0 %v216
    %268 = vmatmul.bf16.gmra.mxu0 %v145
    %v269 = vpop.f32.mrf.mxu0
    %v270 = vadd.f32 %v164, %v269
    %v271 = vpop.f32.mrf.mxu0
    %272 = vdwg.mxu0
    %v273 = vmax.f32 %v257, 0.0
    %v274 = vmax.f32 %v270, 0.0
    %v275 = vpack.c.bf16 %v273, %v273
    %v276 = vpack.c.bf16 %v274, %v274
    %v277 = vld [vmem:[#allocation8] sm:$0xf]
    %v278 = vld [vmem:[#allocation8 + $0x4] sm:$0xf]
    %v279 = vld [vmem:[#allocation8 + $0x8] sm:$0xf]
    %v280 = vld [vmem:[#allocation8 + $0xc] sm:$0xf]
    %v281 = vld [vmem:[#allocation8 + $0x10] sm:$0xf]
    %v282 = vld [vmem:[#allocation8 + $0x14] sm:$0xf]
    %v283 = vld [vmem:[#allocation8 + $0x18] sm:$0xf]
    %v284 = vld [vmem:[#allocation8 + $0x1c] sm:$0xf]
    %v285 = vld [vmem:[#allocation8 + $0x20] sm:$0xf]
    %v286 = vld [vmem:[#allocation8 + $0x24] sm:$0xf]
    %v287 = vld [vmem:[#allocation8 + $0x28] sm:$0xf]
    %v288 = vld [vmem:[#allocation8 + $0x2c] sm:$0xf]
    %v289 = vld [vmem:[#allocation8 + $0x30] sm:$0xf]
    %v290 = vld [vmem:[#allocation8 + $0x34] sm:$0xf]
    %v291 = vld [vmem:[#allocation8 + $0x38] sm:$0xf]
    %v292 = vld [vmem:[#allocation8 + $0x3c] sm:$0xf]
    %v293 = vld [vmem:[#allocation8 + $0x40] sm:$0xf]
    %v294 = vld [vmem:[#allocation8 + $0x44] sm:$0xf]
    %v295 = vld [vmem:[#allocation8 + $0x48] sm:$0xf]
    %v296 = vld [vmem:[#allocation8 + $0x4c] sm:$0xf]
    %v297 = vld [vmem:[#allocation8 + $0x50] sm:$0xf]
    %v298 = vld [vmem:[#allocation8 + $0x54] sm:$0xf]
    %v299 = vld [vmem:[#allocation8 + $0x58] sm:$0xf]
    %v300 = vld [vmem:[#allocation8 + $0x5c] sm:$0xf]
    %v301 = vld [vmem:[#allocation8 + $0x60] sm:$0xf]
    %v302 = vld [vmem:[#allocation8 + $0x64] sm:$0xf]
    %v303 = vld [vmem:[#allocation8 + $0x68] sm:$0xf]
    %v304 = vld [vmem:[#allocation8 + $0x6c] sm:$0xf]
    %v305 = vld [vmem:[#allocation8 + $0x70] sm:$0xf]
    %v306 = vld [vmem:[#allocation8 + $0x74] sm:$0xf]
    %v307 = vld [vmem:[#allocation8 + $0x78] sm:$0xf]
    %v308 = vld [vmem:[#allocation8 + $0x7c] sm:$0xf]
    %v310 = vperm.slane %v112, 0
    %v344 = vunpack.c.l.b16 %v277
    %v345 = vunpack.c.l.b16 %v278
    %v346 = vunpack.c.l.b16 %v279
    %v347 = vunpack.c.l.b16 %v280
    %v348 = vunpack.c.l.b16 %v281
    %v349 = vunpack.c.l.b16 %v282
    %v350 = vunpack.c.l.b16 %v283
    %v351 = vunpack.c.l.b16 %v284
    %v352 = vunpack.c.l.b16 %v285
    %v353 = vunpack.c.l.b16 %v286
    %v354 = vunpack.c.l.b16 %v287
    %v355 = vunpack.c.l.b16 %v288
    %v356 = vunpack.c.l.b16 %v289
    %v357 = vunpack.c.l.b16 %v290
    %v358 = vunpack.c.l.b16 %v291
    %v359 = vunpack.c.l.b16 %v292
    %v360 = vunpack.c.l.b16 %v293
    %v361 = vunpack.c.l.b16 %v294
    %v362 = vunpack.c.l.b16 %v295
    %v363 = vunpack.c.l.b16 %v296
    %v364 = vunpack.c.l.b16 %v297
    %v365 = vunpack.c.l.b16 %v298
    %v366 = vunpack.c.l.b16 %v299
    %v367 = vunpack.c.l.b16 %v300
    %v368 = vunpack.c.l.b16 %v301
    %v369 = vunpack.c.l.b16 %v302
    %v370 = vunpack.c.l.b16 %v303
    %v371 = vunpack.c.l.b16 %v304
    %v372 = vunpack.c.l.b16 %v305
    %v373 = vunpack.c.l.b16 %v306
    %v374 = vunpack.c.l.b16 %v307
    %v375 = vunpack.c.l.b16 %v308
    %v376 = vpack.c.b16 %v345, %v344
    %v377 = vpack.c.b16 %v347, %v346
    %v378 = vpack.c.b16 %v349, %v348
    %v379 = vpack.c.b16 %v351, %v350
    %v380 = vpack.c.b16 %v353, %v352
    %v381 = vpack.c.b16 %v355, %v354
    %v382 = vpack.c.b16 %v357, %v356
    %v383 = vpack.c.b16 %v359, %v358
    %v384 = vpack.c.b16 %v361, %v360
    %v385 = vpack.c.b16 %v363, %v362
    %v386 = vpack.c.b16 %v365, %v364
    %v387 = vpack.c.b16 %v367, %v366
    %v388 = vpack.c.b16 %v369, %v368
    %v389 = vpack.c.b16 %v371, %v370
    %v390 = vpack.c.b16 %v373, %v372
    %v391 = vpack.c.b16 %v375, %v374
    %408 = vmatpush.bf16.msra.mxu0 %v383
    %409 = vmatpush.bf16.msra.mxu0 %v382
    %410 = vmatpush.bf16.msra.mxu0 %v381
    %411 = vmatpush.bf16.msra.mxu0 %v380
    %412 = vmatpush.bf16.msra.mxu0 %v379
    %413 = vmatpush.bf16.msra.mxu0 %v378
    %414 = vmatpush.bf16.msra.mxu0 %v377
    %415 = vmatpush.bf16.msra.mxu0 %v376
    %416 = vmatmul.bf16.gmra.mxu0 %v275
    %v417 = vpop.f32.mrf.mxu0
    %v418 = vadd.f32 %v310, %v417
    %v419 = vpop.f32.mrf.mxu0
    %420 = vdwg.mxu0
    %421 = vmatpush.bf16.msra.mxu0 %v391
    %422 = vmatpush.bf16.msra.mxu0 %v390
    %423 = vmatpush.bf16.msra.mxu0 %v389
    %424 = vmatpush.bf16.msra.mxu0 %v388
    %425 = vmatpush.bf16.msra.mxu0 %v387
    %426 = vmatpush.bf16.msra.mxu0 %v386
    %427 = vmatpush.bf16.msra.mxu0 %v385
    %428 = vmatpush.bf16.msra.mxu0 %v384
    %429 = vmatmul.bf16.gmra.mxu0 %v276
    %v430 = vpop.f32.mrf.mxu0
    %v431 = vadd.f32 %v418, %v430
    %v432 = vpop.f32.mrf.mxu0
    %433 = vdwg.mxu0
    %v434 = vmax.f32 %v431, 0.0
    %v435 = vpack.c.bf16 %v434, %v434
    %v436 = vld [vmem:[#allocation10] sm:$0xf]
    %v437 = vld [vmem:[#allocation10 + $0x4] sm:$0xf]
    %v438 = vld [vmem:[#allocation10 + $0x8] sm:$0xf]
    %v439 = vld [vmem:[#allocation10 + $0xc] sm:$0xf]
    %v440 = vld [vmem:[#allocation10 + $0x10] sm:$0xf]
    %v441 = vld [vmem:[#allocation10 + $0x14] sm:$0xf]
    %v442 = vld [vmem:[#allocation10 + $0x18] sm:$0xf]
    %v443 = vld [vmem:[#allocation10 + $0x1c] sm:$0xf]
    %v444 = vld [vmem:[#allocation10 + $0x20] sm:$0xf]
    %v445 = vld [vmem:[#allocation10 + $0x24] sm:$0xf]
    %v446 = vld [vmem:[#allocation10 + $0x28] sm:$0xf]
    %v447 = vld [vmem:[#allocation10 + $0x2c] sm:$0xf]
    %v448 = vld [vmem:[#allocation10 + $0x30] sm:$0xf]
    %v449 = vld [vmem:[#allocation10 + $0x34] sm:$0xf]
    %v450 = vld [vmem:[#allocation10 + $0x38] sm:$0xf]
    %v451 = vld [vmem:[#allocation10 + $0x3c] sm:$0xf]
    %v453 = vperm.slane %v113, 0
    %v471 = vunpack.c.l.b16 %v436
    %v472 = vunpack.c.l.b16 %v437
    %v473 = vunpack.c.l.b16 %v438
    %v474 = vunpack.c.l.b16 %v439
    %v475 = vunpack.c.l.b16 %v440
    %v476 = vunpack.c.l.b16 %v441
    %v477 = vunpack.c.l.b16 %v442
    %v478 = vunpack.c.l.b16 %v443
    %v479 = vunpack.c.l.b16 %v444
    %v480 = vunpack.c.l.b16 %v445
    %v481 = vunpack.c.l.b16 %v446
    %v482 = vunpack.c.l.b16 %v447
    %v483 = vunpack.c.l.b16 %v448
    %v484 = vunpack.c.l.b16 %v449
    %v485 = vunpack.c.l.b16 %v450
    %v486 = vunpack.c.l.b16 %v451
    %v487 = vpack.c.b16 %v472, %v471
    %v488 = vpack.c.b16 %v474, %v473
    %v489 = vpack.c.b16 %v476, %v475
    %v490 = vpack.c.b16 %v478, %v477
    %v491 = vpack.c.b16 %v480, %v479
    %v492 = vpack.c.b16 %v482, %v481
    %v493 = vpack.c.b16 %v484, %v483
    %v494 = vpack.c.b16 %v486, %v485
    %503 = vmatpush.bf16.msra.mxu0 %v494
    %504 = vmatpush.bf16.msra.mxu0 %v493
    %505 = vmatpush.bf16.msra.mxu0 %v492
    %506 = vmatpush.bf16.msra.mxu0 %v491
    %507 = vmatpush.bf16.msra.mxu0 %v490
    %508 = vmatpush.bf16.msra.mxu0 %v489
    %509 = vmatpush.bf16.msra.mxu0 %v488
    %510 = vmatpush.bf16.msra.mxu0 %v487
    %511 = vmatmul.bf16.gmra.mxu0 %v435
    %v512 = vpop.f32.mrf.mxu0
    %v513 = vadd.f32 %v453, %v512
    %v514 = vpop.f32.mrf.mxu0
    %515 = vdwg.mxu0
    %516 = vst [vmem:[#allocation11] sm:$0xff] %v513
    // Predicated region
    $region58: #{tpu_custom_call.1} parent=1 // pred_check
      _
    $region59: #{tpu_custom_call.1} parent=1 // pred_check_branch
      %518 = sbr.rel (0) target = $region61
    $region60: #{tpu_custom_call.1} parent=1 // pred_region
      %520 = vsyncadd [#allocation4], 0
      %s522 = sshll.u32 [#allocation11], 4
      %s523 = int_to_ptr.vmem [resolvable:$true] %s522
      %s524 = sshll.u32 %s9, 4
      %s525 = int_to_ptr.hbm [resolvable:$true] %s524
      %527 = dma.vmem_to_hbm [thread:$0]  %s523, 128, %s525, [#allocation4]
    $region61: #{tpu_custom_call.1} parent=1 // pred_fallthru
      _
    // Predicated region
    $region62: #{tpu_custom_call.1} parent=1 // pred_check
      _
    $region63: #{tpu_custom_call.1} parent=1 // pred_check_branch
      %529 = sbr.rel (0) target = $region65
    $region64: #{tpu_custom_call.1} parent=1 // pred_region
      %531 = dma.done [#allocation4], 128
    $region65: #{tpu_custom_call.1} parent=1 // pred_fallthru
      _
    %532 = vsyncpa [#allocation3], 1
    %533 = vsyncpa [#allocation6], 1
    %534 = vsyncpa [#allocation9], 1
    %535 = vsyncpa [#allocation4], 1

</llo_original>
